<compile_context>
chip_gen: v7x
topology: tpu7x:2x2x1
jax: 0.10.0
libtpu: 0.0.40
codegen_flags: <defaults>
</compile_context>

<pallas_src>
import functools
import math

import jax
import jax.numpy as jnp
import numpy as np
from jax.experimental import pallas as pl
from jax.experimental.pallas import tpu as pltpu


def _round_up(x, m):
    return (x + m - 1) // m * m


# --------------------------------------------------------------------------- #
# Kernel 1: classification term.  Grid over batch tiles ("parallel").
# --------------------------------------------------------------------------- #
def _ce_kernel(x_ref, cen_ref, g_ref, tgt_ref, o_ref, *,
               cN, B, C_pad, la, gamma, margin):
    i = pl.program_id(0)
    TB = x_ref.shape[0]

    # simInd = x @ centers : canonical (TB,D)x(D,M) layout, bf16 operands, f32 acc.
    simInd = jnp.dot(x_ref[...], cen_ref[...],
                     preferred_element_type=jnp.float32)            # (TB, M_pad) f32

    # Grouped softmax, algebraically fused: simClass = ((e*sim) @ G) / (e @ G).
    # Both G matmuls share one MXU pass by stacking along the sublane axis.
    scaled = simInd * gamma
    rowmax = jnp.max(scaled, axis=1, keepdims=True)  # pad cols are 0; constant cancels
    e = jnp.exp(scaled - rowmax)
    stacked = jnp.concatenate([e, e * simInd], axis=0)              # (2*TB, M_pad) f32
    gsum = jnp.dot(stacked, g_ref[...],
                   preferred_element_type=jnp.float32)              # (2*TB, C_pad) f32
    group_sum = gsum[:TB]
    num = gsum[TB:]
    simClass = num / jnp.maximum(group_sum, 1e-30)                  # padded classes -> 0

    # Margin + cross-entropy per row (all f32).
    tgt = tgt_ref[...]                                              # (TB, 1) int32
    cls_iota = jax.lax.broadcasted_iota(jnp.int32, (TB, C_pad), 1)
    one_hot = (cls_iota == tgt).astype(jnp.float32)
    logits = la * (simClass - margin * one_hot)
    logits = jnp.where(cls_iota < cN, logits, -1e30)                # mask padded classes
    lmax = jnp.max(logits, axis=1, keepdims=True)
    lse = jnp.log(jnp.sum(jnp.exp(logits - lmax), axis=1, keepdims=True)) + lmax
    correct = jnp.sum(one_hot * logits, axis=1, keepdims=True)
    row_iota = jax.lax.broadcasted_iota(jnp.int32, (TB, 1), 0)
    row_valid = ((i * TB + row_iota) < B).astype(jnp.float32)       # zero padded rows
    per_row = (lse - correct) * row_valid                           # (TB, 1)
    o_ref[...] = jnp.broadcast_to(per_row, o_ref.shape)             # lane-dense (TB, 128)


# --------------------------------------------------------------------------- #
# Kernel 2: center regularizer.  Grid over blocks of center rows ("parallel").
# --------------------------------------------------------------------------- #
def _reg_kernel(rows_ref, cen_ref, cls_ref, o_ref, *, K):
    b = pl.program_id(0)
    BLK = rows_ref.shape[0]
    Mp = cen_ref.shape[1]

    # simCenter block = rows @ centers : canonical layout, bf16 operands, f32 acc.
    sim = jnp.dot(rows_ref[...], cen_ref[...],
                  preferred_element_type=jnp.float32)               # (BLK, M_pad) f32

    row_cls = cls_ref[...]                                          # (BLK, 1) int32, -1 on padding
    col_idx = jax.lax.broadcasted_iota(jnp.int32, (BLK, Mp), 1)
    row_idx = b * BLK + jax.lax.broadcasted_iota(jnp.int32, (BLK, Mp), 0)
    # same class & strict upper triangle  <=>  col in (row, (class(row)+1)*K).
    # Padded rows carry class -1 so their window is empty; padded columns lie
    # outside every valid class window.
    mask = ((col_idx > row_idx) & (col_idx < (row_cls + 1) * K)).astype(jnp.float32)
    val = jnp.maximum(2.0 + 1e-5 - 2.0 * sim, 0.0)   # clamp guards tiny fp negatives
    row_reg = jnp.sum(mask * jnp.sqrt(val), axis=1, keepdims=True)  # (BLK, 1)
    o_ref[...] = jnp.broadcast_to(row_reg, o_ref.shape)             # lane-dense (BLK, 128)


# --------------------------------------------------------------------------- #
# Wrapper (the SoftTriple forward pass).
# --------------------------------------------------------------------------- #
def soft_triple_loss(x, fc, target, *, cN, K, la, gamma, tau, margin, tb=256):
    """`gamma` is the kernel-side value, i.e. 1/gamma_hyperparam (as in the module).

    `tb` = batch tile: 256 matches the v6e/v7x 256-tall MXU; use 128 on v5e.
    """
    B, dim = x.shape
    M = cN * K
    assert fc.shape == (dim, M)

    D_pad = _round_up(dim, 128)
    M_pad = _round_up(M, 128)
    C_pad = _round_up(cN, 128)
    TB = min(tb, _round_up(B, 16))   # multiple of 16: safe sublane tiling for bf16 tiles
    B_pad = _round_up(B, TB)
    n_tiles = B_pad // TB

    # Normalize centers once (f32, eps matches F.normalize(p=2, dim=0)); only the
    # bf16 MXU operand stays resident inside the kernels, in the stationary
    # (D_pad, M_pad) layout.
    cen = fc.astype(jnp.float32)
    cen = cen / jnp.maximum(jnp.linalg.norm(cen, axis=0, keepdims=True), 1e-12)
    cen_dm = jnp.zeros((D_pad, M_pad), jnp.bfloat16).at[:dim, :M].set(
        cen.astype(jnp.bfloat16))
    x_p = jnp.zeros((B_pad, D_pad), jnp.bfloat16).at[:B, :dim].set(
        x.astype(jnp.bfloat16))
    tgt_p = jnp.zeros((B_pad, 1), jnp.int32).at[:B, 0].set(target.astype(jnp.int32))

    # Group membership G[m, c] = 1 iff center m belongs to valid class c
    # (0/1 values; kept f32 so the e / e*sim matmuls stay in f32).
    m_idx = np.arange(M_pad)[:, None]
    c_idx = np.arange(C_pad)[None, :]
    G = jnp.asarray(((m_idx >= c_idx * K) & (m_idx < (c_idx + 1) * K)
                     & (c_idx < cN)).astype(np.float32))

    f32 = 4
    vmem1 = (2 * M_pad * D_pad * 2            # resident bf16 centers (double-buffered)
             + 2 * M_pad * C_pad * f32        # resident G
             + 2 * TB * D_pad * 2             # x tiles
             + 2 * TB * f32                   # target tiles
             + 2 * TB * 128 * f32             # output tiles
             + 10 * TB * M_pad * f32          # f32 (TB, M_pad) temporaries
             + 8 * TB * C_pad * f32)          # f32 (TB, C_pad) temporaries
    ce_kernel = functools.partial(_ce_kernel, cN=cN, B=B, C_pad=C_pad,
                                  la=la, gamma=gamma, margin=margin)
    # TODO(synk): for very large M*dim the resident (D_pad, M_pad) centers exceed
    # VMEM; add an "arbitrary" M-tiling grid axis in that regime.
    per_row_loss = pl.pallas_call(
        ce_kernel,
        out_shape=jax.ShapeDtypeStruct((B_pad, 128), jnp.float32),
        grid=(n_tiles,),
        in_specs=[
            pl.BlockSpec((TB, D_pad), lambda i: (i, 0)),      # x batch tile (bf16)
            pl.BlockSpec((D_pad, M_pad), lambda i: (0, 0)),   # normalized centers (resident)
            pl.BlockSpec((M_pad, C_pad), lambda i: (0, 0)),   # group matrix (resident)
            pl.BlockSpec((TB, 1), lambda i: (i, 0)),          # targets
        ],
        out_specs=pl.BlockSpec((TB, 128), lambda i: (i, 0)),  # lane-dense per-row losses
        compiler_params=pltpu.CompilerParams(
            dimension_semantics=("parallel",),
            vmem_limit_bytes=int(min(64 << 20, max(16 << 20, 2 * vmem1)))),
    )(x_p, cen_dm, G, tgt_p)

    loss = jnp.sum(per_row_loss[:B, 0]) / B

    if tau > 0.0 and K > 1:
        BLK = 128
        n_blk = M_pad // BLK
        # Moving operand: center rows (M_pad, D_pad); class id per row (-1 on
        # padding) drives the same-class / strict-upper mask inside the kernel.
        cen_md = jnp.zeros((M_pad, D_pad), jnp.bfloat16).at[:M, :dim].set(
            cen.T.astype(jnp.bfloat16))
        cls_rows = jnp.full((M_pad, 1), -1, jnp.int32).at[:M, 0].set(
            jnp.arange(M, dtype=jnp.int32) // K)
        vmem2 = (2 * M_pad * D_pad * 2 + 2 * BLK * D_pad * 2 + 2 * BLK * f32
                 + 2 * BLK * 128 * f32 + 6 * BLK * M_pad * f32)
        reg_kernel = functools.partial(_reg_kernel, K=K)
        per_row_reg = pl.pallas_call(
            reg_kernel,
            out_shape=jax.ShapeDtypeStruct((M_pad, 128), jnp.float32),
            grid=(n_blk,),
            in_specs=[
                pl.BlockSpec((BLK, D_pad), lambda b: (b, 0)),     # block of center rows
                pl.BlockSpec((D_pad, M_pad), lambda b: (0, 0)),   # stationary centers (resident)
                pl.BlockSpec((BLK, 1), lambda b: (b, 0)),         # class id per row
            ],
            out_specs=pl.BlockSpec((BLK, 128), lambda b: (b, 0)),
            compiler_params=pltpu.CompilerParams(
                dimension_semantics=("parallel",),
                vmem_limit_bytes=int(min(64 << 20, max(16 << 20, 2 * vmem2)))),
        )(cen_md, cen_dm, cls_rows)
        reg = jnp.sum(per_row_reg[:, 0]) / (cN * K * (K - 1.0))
        loss = loss + tau * reg
    return loss


def kaiming_uniform_fc(key, dim, cNK):
    # init.kaiming_uniform_(fc, a=sqrt(5)) on a (dim, cN*K) tensor: fan_in = cN*K
    a = math.sqrt(5.0)
    gain = math.sqrt(2.0 / (1.0 + a * a))
    bound = gain * math.sqrt(3.0 / cNK)
    return jax.random.uniform(key, (dim, cNK), jnp.float32, -bound, bound)


def _soft_triple_reference(x, fc, target, *, cN, K, la, gamma, tau, margin,
                           mxu_dtype=jnp.float32):
    # Pure-JAX mirror of the PyTorch forward.  `mxu_dtype` controls the operand
    # dtype of the two matmuls only (to mirror the kernel's bf16 MXU operands).
    prec = jax.lax.Precision.HIGHEST if mxu_dtype == jnp.float32 else None
    centers = fc / jnp.maximum(jnp.linalg.norm(fc, axis=0, keepdims=True), 1e-12)
    xm = x.astype(mxu_dtype)
    cm = centers.astype(mxu_dtype)
    simInd = jnp.dot(xm, cm, precision=prec, preferred_element_type=jnp.float32)
    simStruc = simInd.reshape(-1, cN, K)
    prob = jax.nn.softmax(simStruc * gamma, axis=2)
    simClass = jnp.sum(prob * simStruc, axis=2)
    marginM = jax.nn.one_hot(target, cN, dtype=jnp.float32) * margin
    logits = la * (simClass - marginM)
    logp = jax.nn.log_softmax(logits, axis=1)
    loss_cls = -jnp.mean(logp[jnp.arange(x.shape[0]), target])
    if tau > 0 and K > 1:
        simCenter = jnp.dot(cm.T, cm, precision=prec,
                            preferred_element_type=jnp.float32)
        w = np.zeros((cN * K, cN * K), dtype=np.float32)
        for a in range(cN):
            for b in range(K):
                w[a * K + b, a * K + b + 1:(a + 1) * K] = 1.0
        reg = jnp.sum(jnp.asarray(w) *
                      jnp.sqrt(jnp.maximum(2.0 + 1e-5 - 2.0 * simCenter, 0.0)))
        return loss_cls + tau * reg / (cN * K * (K - 1.0))
    return loss_cls


if __name__ == "__main__":
    # SoftTriple hyperparameters (paper defaults) and small synthetic shapes.
    la, gamma_hp, tau, margin = 20.0, 0.1, 0.2, 0.01
    dim, cN, K, B = 32, 8, 4, 8

    key = jax.random.PRNGKey(0)
    k_fc, k_x, k_t = jax.random.split(key, 3)

    fc = kaiming_uniform_fc(k_fc, dim, cN * K)                # parameter (dim, cN*K)
    x = jax.random.normal(k_x, (B, dim), jnp.float32)
    x = x / jnp.linalg.norm(x, axis=1, keepdims=True)         # unit-norm embeddings
    target = jax.random.randint(k_t, (B,), 0, cN, jnp.int32)  # class labels

    loss = soft_triple_loss(x, fc, target, cN=cN, K=K, la=la,
                            gamma=1.0 / gamma_hp, tau=tau, margin=margin)
    loss = jax.block_until_ready(loss)

    # Tight structural check vs a reference that also feeds bf16 operands to the
    # two matmuls (everything else f32), then a looser sanity band vs the full-f32
    # reference (bf16 MXU operands shift the logits by O(la * 2^-8)).
    ref_bf16 = _soft_triple_reference(x, fc, target, cN=cN, K=K, la=la,
                                      gamma=1.0 / gamma_hp, tau=tau, margin=margin,
                                      mxu_dtype=jnp.bfloat16)
    ref_f32 = _soft_triple_reference(x, fc, target, cN=cN, K=K, la=la,
                                     gamma=1.0 / gamma_hp, tau=tau, margin=margin,
                                     mxu_dtype=jnp.float32)
    np.testing.assert_allclose(np.asarray(loss), np.asarray(ref_bf16),
                               rtol=2e-3, atol=2e-3)
    np.testing.assert_allclose(np.asarray(loss), np.asarray(ref_f32),
                               rtol=5e-2, atol=1e-1)
    print("KERNEL_OK")
</pallas_src>

<mosaic_0001>
module attributes {stable_mosaic.version = 11 : i64} {
  func.func @_ce_kernel(%arg0: i32, %arg1: memref<16x128xbf16, #tpu.memory_space<vmem>>, %arg2: memref<128x128xbf16, #tpu.memory_space<vmem>>, %arg3: memref<128x128xf32, #tpu.memory_space<vmem>>, %arg4: memref<16x1xi32, #tpu.memory_space<vmem>>, %arg5: memref<16x128xf32, #tpu.memory_space<vmem>>) attributes {dimension_semantics = [#tpu.dimension_semantics<parallel>], iteration_bounds = array<i64: 1>, scalar_prefetch = 0 : i64, scratch_operands = 0 : i64, tpu.core_type = #tpu.core_type<tc>, window_params = [{transform_indices = @transform_0, window_bounds = array<i64: 16, 128>}, {pipeline_mode = #tpu.pipeline_mode<synchronous>, transform_indices = @transform_1, window_bounds = array<i64: 128, 128>}, {pipeline_mode = #tpu.pipeline_mode<synchronous>, transform_indices = @transform_2, window_bounds = array<i64: 128, 128>}, {transform_indices = @transform_3, window_bounds = array<i64: 16, 1>}, {transform_indices = @transform_4, window_bounds = array<i64: 16, 128>}]} {
    %c0 = arith.constant 0 : index
    %c0_0 = arith.constant 0 : index
    %0 = vector.load %arg1[%c0, %c0_0] : memref<16x128xbf16, #tpu.memory_space<vmem>>, vector<16x128xbf16>
    %c0_1 = arith.constant 0 : index
    %c0_2 = arith.constant 0 : index
    %1 = vector.load %arg2[%c0_1, %c0_2] : memref<128x128xbf16, #tpu.memory_space<vmem>>, vector<128x128xbf16>
    %cst = arith.constant dense<0.000000e+00> : vector<16x128xf32>
    %2 = tpu.matmul %0, %1, %cst {dimension_numbers = #tpu.dot_dimension_numbers<[1], [0], [0], [1], [0, 0, 1, 1], [], []>} : vector<16x128xbf16>, vector<128x128xbf16>, vector<16x128xf32> -> vector<16x128xf32>
    %cst_3 = arith.constant 1.000000e+01 : f32
    %3 = vector.broadcast %cst_3 : f32 to vector<16x128xf32>
    %4 = arith.mulf %2, %3 : vector<16x128xf32>
    %cst_4 = arith.constant dense<0xFF800000> : vector<16xf32>
    %5 = vector.multi_reduction <maximumf>, %4, %cst_4 [1] : vector<16x128xf32> to vector<16xf32>
    %6 = vector.shape_cast %5 : vector<16xf32> to vector<16x1xf32>
    %7 = vector.broadcast %6 : vector<16x1xf32> to vector<16x128xf32>
    %8 = arith.subf %4, %7 : vector<16x128xf32>
    %9 = math.exp %8 : vector<16x128xf32>
    %10 = arith.mulf %9, %2 : vector<16x128xf32>
    %11 = tpu.concatenate %9, %10 in 0 : vector<16x128xf32>, vector<16x128xf32> -> vector<32x128xf32>
    %c0_5 = arith.constant 0 : index
    %c0_6 = arith.constant 0 : index
    %12 = vector.load %arg3[%c0_5, %c0_6] : memref<128x128xf32, #tpu.memory_space<vmem>>, vector<128x128xf32>
    %cst_7 = arith.constant dense<0.000000e+00> : vector<32x128xf32>
    %13 = tpu.matmul %11, %12, %cst_7 {dimension_numbers = #tpu.dot_dimension_numbers<[1], [0], [0], [1], [0, 0, 1, 1], [], []>} : vector<32x128xf32>, vector<128x128xf32>, vector<32x128xf32> -> vector<32x128xf32>
    %14 = vector.extract_strided_slice %13 {offsets = [0, 0], sizes = [16, 128], strides = [1, 1]} : vector<32x128xf32> to vector<16x128xf32>
    %15 = vector.extract_strided_slice %13 {offsets = [16, 0], sizes = [16, 128], strides = [1, 1]} : vector<32x128xf32> to vector<16x128xf32>
    %cst_8 = arith.constant 1.000000e-30 : f32
    %16 = vector.broadcast %cst_8 : f32 to vector<16x128xf32>
    %17 = arith.maximumf %14, %16 : vector<16x128xf32>
    %18 = arith.divf %15, %17 : vector<16x128xf32>
    %c0_9 = arith.constant 0 : index
    %c0_10 = arith.constant 0 : index
    %19 = vector.load %arg4[%c0_9, %c0_10] : memref<16x1xi32, #tpu.memory_space<vmem>>, vector<16x1xi32>
    %20 = tpu.iota {dimensions = array<i32: 1>} : vector<16x128xi32>
    %21 = vector.broadcast %19 : vector<16x1xi32> to vector<16x128xi32>
    %22 = arith.cmpi eq, %20, %21 : vector<16x128xi32>
    %23 = arith.extui %22 : vector<16x128xi1> to vector<16x128xi32>
    %24 = arith.sitofp %23 : vector<16x128xi32> to vector<16x128xf32>
    %cst_11 = arith.constant 0.00999999977 : f32
    %25 = vector.broadcast %cst_11 : f32 to vector<16x128xf32>
    %26 = arith.mulf %25, %24 : vector<16x128xf32>
    %27 = arith.subf %18, %26 : vector<16x128xf32>
    %cst_12 = arith.constant 2.000000e+01 : f32
    %28 = vector.broadcast %cst_12 : f32 to vector<16x128xf32>
    %29 = arith.mulf %28, %27 : vector<16x128xf32>
    %c8_i32 = arith.constant 8 : i32
    %30 = vector.broadcast %c8_i32 : i32 to vector<16x128xi32>
    %31 = arith.cmpi slt, %20, %30 : vector<16x128xi32>
    %cst_13 = arith.constant -1.000000e+30 : f32
    %32 = vector.broadcast %cst_13 : f32 to vector<16x128xf32>
    %33 = arith.select %31, %29, %32 : vector<16x128xi1>, vector<16x128xf32>
    %cst_14 = arith.constant dense<0xFF800000> : vector<16xf32>
    %34 = vector.multi_reduction <maximumf>, %33, %cst_14 [1] : vector<16x128xf32> to vector<16xf32>
    %35 = vector.shape_cast %34 : vector<16xf32> to vector<16x1xf32>
    %36 = vector.broadcast %35 : vector<16x1xf32> to vector<16x128xf32>
    %37 = arith.subf %33, %36 : vector<16x128xf32>
    %38 = math.exp %37 : vector<16x128xf32>
    %cst_15 = arith.constant dense<0.000000e+00> : vector<16xf32>
    %39 = vector.multi_reduction <add>, %38, %cst_15 [1] : vector<16x128xf32> to vector<16xf32>
    %40 = vector.shape_cast %39 : vector<16xf32> to vector<16x1xf32>
    %41 = math.log %40 : vector<16x1xf32>
    %42 = arith.addf %41, %35 : vector<16x1xf32>
    %43 = arith.mulf %24, %33 : vector<16x128xf32>
    %cst_16 = arith.constant dense<0.000000e+00> : vector<16xf32>
    %44 = vector.multi_reduction <add>, %43, %cst_16 [1] : vector<16x128xf32> to vector<16xf32>
    %45 = vector.shape_cast %44 : vector<16xf32> to vector<16x1xf32>
    %46 = tpu.iota {dimensions = array<i32: 0>} : vector<16x1xi32>
    %c16_i32 = arith.constant 16 : i32
    %47 = arith.muli %arg0, %c16_i32 : i32
    %48 = vector.broadcast %47 : i32 to vector<16x1xi32>
    %49 = arith.addi %48, %46 : vector<16x1xi32>
    %c8_i32_17 = arith.constant 8 : i32
    %50 = vector.broadcast %c8_i32_17 : i32 to vector<16x1xi32>
    %51 = arith.cmpi slt, %49, %50 : vector<16x1xi32>
    %52 = arith.extui %51 : vector<16x1xi1> to vector<16x1xi32>
    %53 = arith.sitofp %52 : vector<16x1xi32> to vector<16x1xf32>
    %54 = arith.subf %42, %45 : vector<16x1xf32>
    %55 = arith.mulf %54, %53 : vector<16x1xf32>
    %56 = vector.shape_cast %55 : vector<16x1xf32> to vector<16x1xf32>
    %57 = vector.broadcast %56 : vector<16x1xf32> to vector<16x128xf32>
    %c0_18 = arith.constant 0 : index
    %c0_19 = arith.constant 0 : index
    %58 = vector.load %arg5[%c0_18, %c0_19] : memref<16x128xf32, #tpu.memory_space<vmem>>, vector<16x128xf32>
    tpu.vector_store %arg5[%c0_18, %c0_19], %57 {strides = array<i32>} : memref<16x128xf32, #tpu.memory_space<vmem>>, vector<16x128xf32>,
    return
  }
  func.func @transform_0(%arg0: i32) -> (i32, i32) {
    %c0_i32 = arith.constant 0 : i32
    %c0_i32_0 = arith.constant 0 : i32
    return %arg0, %c0_i32 : i32, i32
  }
  func.func @transform_1(%arg0: i32) -> (i32, i32) {
    %c0_i32 = arith.constant 0 : i32
    %c0_i32_0 = arith.constant 0 : i32
    %c0_i32_1 = arith.constant 0 : i32
    return %c0_i32, %c0_i32_0 : i32, i32
  }
  func.func @transform_2(%arg0: i32) -> (i32, i32) {
    %c0_i32 = arith.constant 0 : i32
    %c0_i32_0 = arith.constant 0 : i32
    %c0_i32_1 = arith.constant 0 : i32
    return %c0_i32, %c0_i32_0 : i32, i32
  }
  func.func @transform_3(%arg0: i32) -> (i32, i32) {
    %c0_i32 = arith.constant 0 : i32
    %c0_i32_0 = arith.constant 0 : i32
    return %arg0, %c0_i32 : i32, i32
  }
  func.func @transform_4(%arg0: i32) -> (i32, i32) {
    %c0_i32 = arith.constant 0 : i32
    %c0_i32_0 = arith.constant 0 : i32
    return %arg0, %c0_i32 : i32, i32
  }
}

</mosaic_0001>

<llo_original>
// kernel: tpu_custom_call.1
$region0: #{tpu_custom_call.1}
  #allocation0 [shape = 'u32[]', space=smem, size = 0x4, offset = 0x4, fixed_abs, tag = 'smem constant byte address 0x4 - core index']
  #allocation1 [shape = 'u32[144,128]{1,0:T(1,128)}', space=vmem, size = 0x12000, scoped, tag = 'internal scratch']
  %s0 = inlined_call_operand.vmem [shape: bf16[16,128], index: 0, kind: input, shape index: {}]
  %s1 = inlined_call_operand.hbm [shape: bf16[128,128], index: 1, kind: input, shape index: {}]
  %s2 = inlined_call_operand.hbm [shape: f32[128,128], index: 2, kind: input, shape index: {}]
  %s3 = inlined_call_operand.vmem [shape: s32[16,1], index: 3, kind: input, shape index: {}]
  %s4 = inlined_call_operand.hbm [shape: f32[16,128], index: 4, kind: output, shape index: {}]
  %s5 = sld [smem:[#allocation0]]
  $region34: #{tpu_custom_call.1} parent=0
    _
  %s7 = ssub.s32 1, %s5
  %s8 = scalar_select 0, %s7, %s5
  $region1: #{tpu_custom_call.1} parent=0
    #allocation2 [shape = 'u8[32768]{0}', space=vmem, size = 0x8000, scoped, tag = 'input window, operand 1, single buffered']
    #allocation3 [shape = 's32[1]{0}', space=sflag, size = 0x4, scoped, tag = 'scoped memory for tpu_custom_call.1']
    #allocation4 [shape = 's32[1]{0}', space=sflag, size = 0x4, scoped, tag = 'scoped memory for tpu_custom_call.1']
    #allocation5 [shape = 'u8[65536]{0}', space=vmem, size = 0x10000, scoped, tag = 'input window, operand 2, single buffered']
    #allocation6 [shape = 's32[1]{0}', space=sflag, size = 0x4, scoped, tag = 'scoped memory for tpu_custom_call.1']
    #allocation7 [shape = 'u8[8192]{0}', space=vmem, size = 0x2000, scoped, tag = 'output window, operand 0, single buffered']
    %9 = vsyncpa [#allocation3], 0
    %10 = vsyncpa [#allocation6], 0
    %11 = vsyncpa [#allocation4], 0
    // Predicated region
    $region2: #{tpu_custom_call.1} parent=1 // pred_check
      _
    $region3: #{tpu_custom_call.1} parent=1 // pred_check_branch
      %13 = sbr.rel (0) target = $region5
    $region4: #{tpu_custom_call.1} parent=1 // pred_region
      _
    $region5: #{tpu_custom_call.1} parent=1 // pred_fallthru
      _
    // Predicated region
    $region6: #{tpu_custom_call.1} parent=1 // pred_check
      _
    $region7: #{tpu_custom_call.1} parent=1 // pred_check_branch
      %15 = sbr.rel (0) target = $region9
    $region8: #{tpu_custom_call.1} parent=1 // pred_region
      %s17 = ssub.s32 1024, 1024
      %18 = vsyncadd [#allocation3], %s17
      %s19 = sshll.u32 [#allocation2], 4
      %s20 = int_to_ptr.vmem [resolvable:$true] %s19
      %25 = dma.hbm_to_vmem [thread:$0]  %s1, 1024, %s20, [#allocation3], 64, 64, 4
    $region9: #{tpu_custom_call.1} parent=1 // pred_fallthru
      _
    // Predicated region
    $region10: #{tpu_custom_call.1} parent=1 // pred_check
      _
    $region11: #{tpu_custom_call.1} parent=1 // pred_check_branch
      %27 = sbr.rel (0) target = $region13
    $region12: #{tpu_custom_call.1} parent=1 // pred_region
      %s29 = ssub.s32 2048, 2048
      %30 = vsyncadd [#allocation6], %s29
      %s31 = sshll.u32 [#allocation5], 4
      %s32 = int_to_ptr.vmem [resolvable:$true] %s31
      %37 = dma.hbm_to_vmem [thread:$0]  %s2, 2048, %s32, [#allocation6], 128, 128, 8
    $region13: #{tpu_custom_call.1} parent=1 // pred_fallthru
      _
    // Predicated region
    $region14: #{tpu_custom_call.1} parent=1 // pred_check
      _
    $region15: #{tpu_custom_call.1} parent=1 // pred_check_branch
      %39 = sbr.rel (0) target = $region17
    $region16: #{tpu_custom_call.1} parent=1 // pred_region
      _
    $region17: #{tpu_custom_call.1} parent=1 // pred_fallthru
      _
    // Predicated region
    $region18: #{tpu_custom_call.1} parent=1 // pred_check
      _
    $region19: #{tpu_custom_call.1} parent=1 // pred_check_branch
      %41 = sbr.rel (0) target = $region21
    $region20: #{tpu_custom_call.1} parent=1 // pred_region
      %42 = dma.done [#allocation3], 1024
    $region21: #{tpu_custom_call.1} parent=1 // pred_fallthru
      _
    // Predicated region
    $region22: #{tpu_custom_call.1} parent=1 // pred_check
      _
    $region23: #{tpu_custom_call.1} parent=1 // pred_check_branch
      %44 = sbr.rel (0) target = $region25
    $region24: #{tpu_custom_call.1} parent=1 // pred_region
      %45 = dma.done [#allocation6], 2048
    $region25: #{tpu_custom_call.1} parent=1 // pred_fallthru
      _
    %v47 = vld [vmem:[%s0] sm:$0xf]
    %v48 = vld [vmem:[%s0 + $0x4] sm:$0xf]
    %v49 = vld [vmem:[#allocation2] sm:$0xf]
    %v50 = vld [vmem:[#allocation2 + $0x4] sm:$0xf]
    %v51 = vld [vmem:[#allocation2 + $0x8] sm:$0xf]
    %v52 = vld [vmem:[#allocation2 + $0xc] sm:$0xf]
    %v53 = vld [vmem:[#allocation2 + $0x10] sm:$0xf]
    %v54 = vld [vmem:[#allocation2 + $0x14] sm:$0xf]
    %v55 = vld [vmem:[#allocation2 + $0x18] sm:$0xf]
    %v56 = vld [vmem:[#allocation2 + $0x1c] sm:$0xf]
    %v57 = vld [vmem:[#allocation2 + $0x20] sm:$0xf]
    %v58 = vld [vmem:[#allocation2 + $0x24] sm:$0xf]
    %v59 = vld [vmem:[#allocation2 + $0x28] sm:$0xf]
    %v60 = vld [vmem:[#allocation2 + $0x2c] sm:$0xf]
    %v61 = vld [vmem:[#allocation2 + $0x30] sm:$0xf]
    %v62 = vld [vmem:[#allocation2 + $0x34] sm:$0xf]
    %v63 = vld [vmem:[#allocation2 + $0x38] sm:$0xf]
    %v64 = vld [vmem:[#allocation2 + $0x3c] sm:$0xf]
    %v67 = vunpack.c.l.b16 %v47
    %v68 = vunpack.c.l.b16 %v48
    %v69 = vpack.c.b16 %v68, %v67
    %v87 = vunpack.c.l.b16 %v49
    %v88 = vunpack.c.l.b16 %v50
    %v89 = vunpack.c.l.b16 %v51
    %v90 = vunpack.c.l.b16 %v52
    %v91 = vunpack.c.l.b16 %v53
    %v92 = vunpack.c.l.b16 %v54
    %v93 = vunpack.c.l.b16 %v55
    %v94 = vunpack.c.l.b16 %v56
    %v95 = vunpack.c.l.b16 %v57
    %v96 = vunpack.c.l.b16 %v58
    %v97 = vunpack.c.l.b16 %v59
    %v98 = vunpack.c.l.b16 %v60
    %v99 = vunpack.c.l.b16 %v61
    %v100 = vunpack.c.l.b16 %v62
    %v101 = vunpack.c.l.b16 %v63
    %v102 = vunpack.c.l.b16 %v64
    %v103 = vpack.c.b16 %v88, %v87
    %v104 = vpack.c.b16 %v90, %v89
    %v105 = vpack.c.b16 %v92, %v91
    %v106 = vpack.c.b16 %v94, %v93
    %v107 = vpack.c.b16 %v96, %v95
    %v108 = vpack.c.b16 %v98, %v97
    %v109 = vpack.c.b16 %v100, %v99
    %v110 = vpack.c.b16 %v102, %v101
    %119 = vmatprep.subr.bf16.mxu0 0
    %120 = vmatpush1.bf16.msra.mxu0 %v103
    %121 = vmatprep.subr.bf16.mxu0 0
    %122 = vmatpush1.bf16.msra.mxu0 %v104
    %123 = vmatprep.subr.bf16.mxu0 0
    %124 = vmatpush1.bf16.msra.mxu0 %v105
    %125 = vmatprep.subr.bf16.mxu0 0
    %126 = vmatpush1.bf16.msra.mxu0 %v106
    %127 = vmatprep.subr.bf16.mxu0 0
    %128 = vmatpush1.bf16.msra.mxu0 %v107
    %129 = vmatprep.subr.bf16.mxu0 0
    %130 = vmatpush1.bf16.msra.mxu0 %v108
    %131 = vmatprep.subr.bf16.mxu0 0
    %132 = vmatpush1.bf16.msra.mxu0 %v109
    %133 = vmatprep.subr.bf16.mxu0 0
    %134 = vmatpush1.bf16.msra.mxu0 %v110
    %135 = vmatprep.subr.bf16.mxu0 0
    %136 = vmatpush1.bf16.msra.mxu0 0
    %137 = vmatprep.subr.bf16.mxu0 0
    %138 = vmatpush1.bf16.msra.mxu0 0
    %139 = vmatprep.subr.bf16.mxu0 0
    %140 = vmatpush1.bf16.msra.mxu0 0
    %141 = vmatprep.subr.bf16.mxu0 0
    %142 = vmatpush1.bf16.msra.mxu0 0
    %143 = vmatprep.subr.bf16.mxu0 0
    %144 = vmatpush1.bf16.msra.mxu0 0
    %145 = vmatprep.subr.bf16.mxu0 0
    %146 = vmatpush1.bf16.msra.mxu0 0
    %147 = vmatprep.subr.bf16.mxu0 0
    %148 = vmatpush1.bf16.msra.mxu0 0
    %149 = vmatprep.subr.bf16.mxu0 0
    %150 = vmatpush1.bf16.msra.mxu0 0
    %151 = vmatprep.mubr.bf16.mxu0 0
    %152 = vmatmul.mubr.bf16.gmra.mrb[0].mxu0 %v69
    %v153 = vpop.f32.mrb[0].mxu0
    %v154 = vadd.f32 0.0, %v153
    %v155 = vpop.f32.mrb[0].mxu0
    %v156 = vpop.f32.mrb[0].mxu0
    %v157 = vadd.f32 0.0, %v156
    %v158 = vpop.f32.mrb[0].mxu0
    %159 = vdwg.mxu0
    %v160 = vmul.f32 %v154, 10.0
    %v161 = vmul.f32 %v157, 10.0
    %162 = vmax.xlane.f32.xlu0 %v160
    %v163 = vpop.xlane.xlu0 %162
    %164 = vmax.xlane.f32.xlu0 %v161
    %v165 = vpop.xlane.xlu0 %164
    %v166 = vsub.f32 %v160, %v163
    %v167 = vsub.f32 %v161, %v165
    %v168 = vmul.f32 %v166, 1.442695
    %v169 = vpow.pop %v168
    %v170 = vmul.f32 %v167, 1.442695
    %v171 = vpow.pop %v170
    %v172 = vmul.f32 %v169, %v154
    %v173 = vmul.f32 %v171, %v157
    %v174 = vld [vmem:[#allocation5] sm:$0xff]
    %v175 = vld [vmem:[#allocation5 + $0x8] sm:$0xff]
    %v176 = vld [vmem:[#allocation5 + $0x10] sm:$0xff]
    %v177 = vld [vmem:[#allocation5 + $0x18] sm:$0xff]
    %v178 = vld [vmem:[#allocation5 + $0x20] sm:$0xff]
    %v179 = vld [vmem:[#allocation5 + $0x28] sm:$0xff]
    %v180 = vld [vmem:[#allocation5 + $0x30] sm:$0xff]
    %v181 = vld [vmem:[#allocation5 + $0x38] sm:$0xff]
    %v182 = vld [vmem:[#allocation5 + $0x40] sm:$0xff]
    %v183 = vld [vmem:[#allocation5 + $0x48] sm:$0xff]
    %v184 = vld [vmem:[#allocation5 + $0x50] sm:$0xff]
    %v185 = vld [vmem:[#allocation5 + $0x58] sm:$0xff]
    %v186 = vld [vmem:[#allocation5 + $0x60] sm:$0xff]
    %v187 = vld [vmem:[#allocation5 + $0x68] sm:$0xff]
    %v188 = vld [vmem:[#allocation5 + $0x70] sm:$0xff]
    %v189 = vld [vmem:[#allocation5 + $0x78] sm:$0xff]
    %190 = vmatprep.subr.mxu0 0.0
    %191 = vmatpush1.msra.mxu0 %v174
    %192 = vmatprep.subr.mxu0 0.0
    %193 = vmatpush1.msra.mxu0 %v175
    %194 = vmatprep.subr.mxu0 0.0
    %195 = vmatpush1.msra.mxu0 %v176
    %196 = vmatprep.subr.mxu0 0.0
    %197 = vmatpush1.msra.mxu0 %v177
    %198 = vmatprep.subr.mxu0 0.0
    %199 = vmatpush1.msra.mxu0 %v178
    %200 = vmatprep.subr.mxu0 0.0
    %201 = vmatpush1.msra.mxu0 %v179
    %202 = vmatprep.subr.mxu0 0.0
    %203 = vmatpush1.msra.mxu0 %v180
    %204 = vmatprep.subr.mxu0 0.0
    %205 = vmatpush1.msra.mxu0 %v181
    %206 = vmatprep.subr.mxu0 0.0
    %207 = vmatpush1.msra.mxu0 %v182
    %208 = vmatprep.subr.mxu0 0.0
    %209 = vmatpush1.msra.mxu0 %v183
    %210 = vmatprep.subr.mxu0 0.0
    %211 = vmatpush1.msra.mxu0 %v184
    %212 = vmatprep.subr.mxu0 0.0
    %213 = vmatpush1.msra.mxu0 %v185
    %214 = vmatprep.subr.mxu0 0.0
    %215 = vmatpush1.msra.mxu0 %v186
    %216 = vmatprep.subr.mxu0 0.0
    %217 = vmatpush1.msra.mxu0 %v187
    %218 = vmatprep.subr.mxu0 0.0
    %219 = vmatpush1.msra.mxu0 %v188
    %220 = vmatprep.subr.mxu0 0.0
    %221 = vmatpush1.msra.mxu0 %v189
    %222 = vmatprep.subr.mxu0 0.0
    %223 = vmatpush1.msra.mxu0 0.0
    %224 = vmatprep.subr.mxu0 0.0
    %225 = vmatpush1.msra.mxu0 0.0
    %226 = vmatprep.subr.mxu0 0.0
    %227 = vmatpush1.msra.mxu0 0.0
    %228 = vmatprep.subr.mxu0 0.0
    %229 = vmatpush1.msra.mxu0 0.0
    %230 = vmatprep.subr.mxu0 0.0
    %231 = vmatpush1.msra.mxu0 0.0
    %232 = vmatprep.subr.mxu0 0.0
    %233 = vmatpush1.msra.mxu0 0.0
    %234 = vmatprep.subr.mxu0 0.0
    %235 = vmatpush1.msra.mxu0 0.0
    %236 = vmatprep.subr.mxu0 0.0
    %237 = vmatpush1.msra.mxu0 0.0
    %238 = vmatprep.subr.mxu0 0.0
    %239 = vmatpush1.msra.mxu0 0.0
    %240 = vmatprep.subr.mxu0 0.0
    %241 = vmatpush1.msra.mxu0 0.0
    %242 = vmatprep.subr.mxu0 0.0
    %243 = vmatpush1.msra.mxu0 0.0
    %244 = vmatprep.subr.mxu0 0.0
    %245 = vmatpush1.msra.mxu0 0.0
    %246 = vmatprep.subr.mxu0 0.0
    %247 = vmatpush1.msra.mxu0 0.0
    %248 = vmatprep.subr.mxu0 0.0
    %249 = vmatpush1.msra.mxu0 0.0
    %250 = vmatprep.subr.mxu0 0.0
    %251 = vmatpush1.msra.mxu0 0.0
    %252 = vmatprep.subr.mxu0 0.0
    %253 = vmatpush1.msra.mxu0 0.0
    %254 = vmatprep.mubr.f32.mxu0 0.0
    %255 = vmatmul.mubr.f32.gmra.mrb[0].mxu0 %v169
    %v256 = vpop.f32.mrb[0].mxu0
    %v257 = vadd.f32 0.0, %v256
    %v258 = vpop.f32.mrb[0].mxu0
    %259 = vmatprep.mubr.f32.mxu0 0.0
    %260 = vmatmul.mubr.f32.gmra.mrb[0].mxu0 %v171
    %v261 = vpop.f32.mrb[0].mxu0
    %v262 = vadd.f32 0.0, %v261
    %v263 = vpop.f32.mrb[0].mxu0
    %264 = vmatprep.mubr.f32.mxu0 0.0
    %265 = vmatmul.mubr.f32.gmra.mrb[0].mxu0 %v172
    %v266 = vpop.f32.mrb[0].mxu0
    %v267 = vadd.f32 0.0, %v266
    %v268 = vpop.f32.mrb[0].mxu0
    %269 = vmatprep.mubr.f32.mxu0 0.0
    %270 = vmatmul.mubr.f32.gmra.mrb[0].mxu0 %v173
    %v271 = vpop.f32.mrb[0].mxu0
    %v272 = vadd.f32 0.0, %v271
    %v273 = vpop.f32.mrb[0].mxu0
    %274 = vdwg.mxu0
    %v275 = vmax.f32 %v257, 1e-30
    %v276 = vmax.f32 %v262, 1e-30
    %v277 = vrcp.pop %v275
    %v278 = vmul.f32 %v267, %v277
    %v279 = vrcp.pop %v276
    %v280 = vmul.f32 %v272, %v279
    %v281 = vld [vmem:[%s3] sm:$0xff]
    %v282 = vld [vmem:[%s3 + $0x8] sm:$0xff]
    %v283 = vlaneseq
    %v284 = vand.u32 %v283, 127
    %285 = vset.pattern.permute.xlu0 0
    %286 = vperm.xlu0 %285, %v281
    %v287 = vpop.permute.xlu0 %286
    %288 = vset.pattern.permute.xlu0 0
    %289 = vperm.xlu0 %288, %v282
    %v290 = vpop.permute.xlu0 %289
    %vm291 = vcmp.eq.s32.totalorder %v284, %v287
    %vm292 = vcmp.eq.s32.totalorder %v284, %v290
    %v293 = vsel %vm291, 1, 0
    %v294 = vsel %vm292, 1, 0
    %v295 = vcvt.s32.f32 %v293
    %v296 = vcvt.s32.f32 %v294
    %v297 = vmul.f32 %v295, 0.01
    %v298 = vmul.f32 %v296, 0.01
    %v299 = vsub.f32 %v278, %v297
    %v300 = vsub.f32 %v280, %v298
    %v301 = vmul.f32 %v299, 20.0
    %v302 = vmul.f32 %v300, 20.0
    %vm303 = vcmp.lt.s32.totalorder %v284, 8
    %v304 = vsel %vm303, %v301, -1e+30
    %v305 = vsel %vm303, %v302, -1e+30
    %306 = vmax.xlane.f32.xlu0 %v304
    %v307 = vpop.xlane.xlu0 %306
    %308 = vmax.xlane.f32.xlu0 %v305
    %v309 = vpop.xlane.xlu0 %308
    %v310 = vsub.f32 %v304, %v307
    %v311 = vsub.f32 %v305, %v309
    %v312 = vmul.f32 %v310, 1.442695
    %v313 = vpow.pop %v312
    %v314 = vmul.f32 %v311, 1.442695
    %v315 = vpow.pop %v314
    %316 = vadd.xlane.f32.xlu0 %v313
    %v317 = vpop.xlane.xlu0 %316
    %318 = vadd.xlane.f32.xlu0 %v315
    %v319 = vpop.xlane.xlu0 %318
    %v320 = vlog2.pop %v317
    %v321 = vmul.f32 %v320, 0.6931472
    %v322 = vlog2.pop %v319
    %v323 = vmul.f32 %v322, 0.6931472
    %v324 = vadd.f32 %v321, %v307
    %v325 = vadd.f32 %v323, %v309
    %v326 = vmul.f32 %v295, %v304
    %v327 = vmul.f32 %v296, %v305
    %328 = vadd.xlane.f32.xlu0 %v326
    %v329 = vpop.xlane.xlu0 %328
    %330 = vadd.xlane.f32.xlu0 %v327
    %v331 = vpop.xlane.xlu0 %330
    %v332 = vlaneseq
    %v333 = vshrl.u32 %v332, 7
    %v334 = vadd.s32 %v333, 8
    %s335 = smul.u32 0, 16
    %v336 = vstv %s335
    %v337 = vadd.s32 %v336, %v333
    %v338 = vadd.s32 %v336, %v334
    %vm339 = vcmp.lt.s32.totalorder %v337, 8
    %vm340 = vcmp.lt.s32.totalorder %v338, 8
    %v341 = vsel %vm339, 1, 0
    %v342 = vsel %vm340, 1, 0
    %v343 = vcvt.s32.f32 %v341
    %v344 = vcvt.s32.f32 %v342
    %v345 = vsub.f32 %v324, %v329
    %v346 = vsub.f32 %v325, %v331
    %v347 = vmul.f32 %v345, %v343
    %v348 = vmul.f32 %v346, %v344
    %349 = vst [vmem:[#allocation7] sm:$0xff] %v347
    %350 = vst [vmem:[#allocation7 + $0x8] sm:$0xff] %v348
    // Predicated region
    $region26: #{tpu_custom_call.1} parent=1 // pred_check
      _
    $region27: #{tpu_custom_call.1} parent=1 // pred_check_branch
      %352 = sbr.rel (0) target = $region29
    $region28: #{tpu_custom_call.1} parent=1 // pred_region
      %s354 = ssub.s32 256, 256
      %355 = vsyncadd [#allocation4], %s354
      %s356 = sshll.u32 [#allocation7], 4
      %s357 = int_to_ptr.vmem [resolvable:$true] %s356
      %362 = dma.vmem_to_hbm [thread:$0]  %s357, 256, %s4, [#allocation4], 128, 128, 8
    $region29: #{tpu_custom_call.1} parent=1 // pred_fallthru
      _
    // Predicated region
    $region30: #{tpu_custom_call.1} parent=1 // pred_check
      _
    $region31: #{tpu_custom_call.1} parent=1 // pred_check_branch
      %364 = sbr.rel (0) target = $region33
    $region32: #{tpu_custom_call.1} parent=1 // pred_region
      %365 = dma.done [#allocation4], 256
    $region33: #{tpu_custom_call.1} parent=1 // pred_fallthru
      _
    %366 = vsyncpa [#allocation3], 1
    %367 = vsyncpa [#allocation6], 1
    %368 = vsyncpa [#allocation4], 1

</llo_original>
